<compile_context>
chip_gen: v5e
topology: v5e:2x2
jax: 0.10.0
libtpu: 0.0.40
codegen_flags: <defaults>
</compile_context>

<pallas_src>
import math
from functools import partial

import numpy as np
import jax
import jax.numpy as jnp
from jax import lax
from jax.experimental import pallas as pl
from jax.experimental.pallas import tpu as pltpu


# --------------------------------------------------------------------------
# Hardware-aware sizing
# --------------------------------------------------------------------------
def _vmem_capacity_bytes():
    """Per-TensorCore VMEM capacity; conservative fallback = v7x (64 MiB)."""
    try:
        return int(pltpu.get_tpu_info().vmem_capacity_bytes)
    except Exception:  # interpret mode / older jax / non-TPU tracer
        return 64 * 1024 * 1024


def _pick_tq(Sq, Sk, dk, dv, in_bytes, score_bytes, mask_row_bytes, budget):
    """Largest query-tile (multiple of 8, <=512) whose per-step working set
    fits the VMEM budget.  Working set = double-buffered K/V (resident across
    q tiles) + double-buffered Q/out/score/mask blocks + f32 softmax temps."""
    kv = 2 * Sk * (dk + dv) * in_bytes            # K + V blocks (x2 pipeline)

    def ws(t):
        return (kv
                + 2 * t * dk * in_bytes           # Q block
                + 2 * t * dv * in_bytes           # result block
                + 2 * t * Sk * score_bytes        # score block
                + t * Sk * 8                      # f32 s and p temporaries
                + 2 * t * mask_row_bytes)         # int8 mask block (upper bnd)

    cands = ([Sq] if Sq <= 512 else []) + \
            [c for c in (512, 256, 128, 64, 32, 16, 8) if c < Sq]
    for t in cands:
        if ws(t) <= budget:
            return t
    return cands[-1]                              # best effort (smallest tile)


def _compiler_params(vmem_limit_bytes):
    # q-tile axis is "arbitrary": sharding it across v7x's two TensorCores
    # would duplicate the full-Sk K/V blocks in both cores' VMEM and break
    # the K/V revisit optimization.  B/H stay "parallel" for megacore.
    return pltpu.CompilerParams(
        dimension_semantics=("parallel", "parallel", "arbitrary"),
        vmem_limit_bytes=vmem_limit_bytes)


# --------------------------------------------------------------------------
# Kernels
# --------------------------------------------------------------------------
def _softmax_rows(s):
    """Numerically stable softmax along the last axis (f32 in, f32 out)."""
    s_max = jnp.max(s, axis=-1, keepdims=True)
    e = jnp.exp(s - s_max)
    denom = jnp.sum(e, axis=-1, keepdims=True)
    # Approximate reciprocal runs on the EUP slot, off the VPU critical path.
    return e * pl.reciprocal(denom, approx=True)


def _attn_body(q_ref, k_ref, v_ref, out_ref, score_ref, neg_mask):
    d_k = q_ref.shape[-1]
    # Fold 1/sqrt(d_k) into Q (Sq*dk elements instead of Sq*Sk).
    q = q_ref[...] * jnp.asarray(1.0 / math.sqrt(d_k), q_ref.dtype)
    # Q @ K^T: contract the last dims of both operands (native [Sk, dk] RHS,
    # no K relayout; lowers directly to the MXU with f32 accumulation).
    s = lax.dot_general(q, k_ref[...], (((1,), (1,)), ((), ())),
                        preferred_element_type=jnp.float32)
    if neg_mask is not None:
        s = jnp.where(neg_mask, -jnp.inf, s)      # masked_fill_(mask, -inf)
    p = _softmax_rows(s)
    score_ref[...] = p.astype(score_ref.dtype)
    out_ref[...] = jnp.dot(p.astype(v_ref.dtype), v_ref[...],
                           preferred_element_type=jnp.float32
                           ).astype(out_ref.dtype)


def _attn_kernel_nomask(q_ref, k_ref, v_ref, out_ref, score_ref):
    _attn_body(q_ref, k_ref, v_ref, out_ref, score_ref, None)


def _attn_kernel_masked(q_ref, k_ref, v_ref, m_ref, out_ref, score_ref):
    # m_ref: (TQm, Skm) int8, broadcastable to (TQ, Sk); nonzero => -inf.
    _attn_body(q_ref, k_ref, v_ref, out_ref, score_ref, m_ref[...] != 0)


def _attn_kernel_causal(q_ref, k_ref, v_ref, out_ref, score_ref):
    # Causal mask synthesized in-register (mask[i, j] = j > i) — no HBM stream.
    tq = q_ref.shape[0]
    Sk = k_ref.shape[0]
    q0 = pl.program_id(2) * tq
    row = lax.broadcasted_iota(jnp.int32, (tq, Sk), 0) + q0
    col = lax.broadcasted_iota(jnp.int32, (tq, Sk), 1)
    _attn_body(q_ref, k_ref, v_ref, out_ref, score_ref, col > row)


# --------------------------------------------------------------------------
# pallas_call wrappers
# --------------------------------------------------------------------------
def _specs(B, H, Sq, Sk, dk, dv, tq):
    grid = (B, H, pl.cdiv(Sq, tq))
    q_spec = pl.BlockSpec((None, None, tq, dk), lambda b, h, qt: (b, h, qt, 0))
    k_spec = pl.BlockSpec((None, None, Sk, dk), lambda b, h, qt: (b, h, 0, 0))
    v_spec = pl.BlockSpec((None, None, Sk, dv), lambda b, h, qt: (b, h, 0, 0))
    out_spec = pl.BlockSpec((None, None, tq, dv), lambda b, h, qt: (b, h, qt, 0))
    score_spec = pl.BlockSpec((None, None, tq, Sk), lambda b, h, qt: (b, h, qt, 0))
    return grid, q_spec, k_spec, v_spec, out_spec, score_spec


@partial(jax.jit, static_argnames=("tq", "score_dtype", "causal", "vmem_limit"))
def _attention_unmasked_call(query, key, value, *, tq, score_dtype, causal,
                             vmem_limit):
    B, H, Sq, dk = query.shape
    Sk, dv = key.shape[2], value.shape[3]
    grid, q_spec, k_spec, v_spec, out_spec, score_spec = _specs(
        B, H, Sq, Sk, dk, dv, tq)
    out_shapes = (jax.ShapeDtypeStruct((B, H, Sq, dv), query.dtype),
                  jax.ShapeDtypeStruct((B, H, Sq, Sk), score_dtype))
    kernel = _attn_kernel_causal if causal else _attn_kernel_nomask
    return pl.pallas_call(
        kernel,
        grid=grid,
        in_specs=[q_spec, k_spec, v_spec],
        out_specs=(out_spec, score_spec),
        out_shape=out_shapes,
        compiler_params=_compiler_params(vmem_limit),
    )(query, key, value)


@partial(jax.jit, static_argnames=("tq", "score_dtype", "vmem_limit"))
def _attention_masked_call(query, key, value, mask_i8, *, tq, score_dtype,
                           vmem_limit):
    B, H, Sq, dk = query.shape
    Sk, dv = key.shape[2], value.shape[3]
    grid, q_spec, k_spec, v_spec, out_spec, score_spec = _specs(
        B, H, Sq, Sk, dk, dv, tq)

    Bm, Hm, Sqm, Skm = mask_i8.shape
    tqm = tq if Sqm == Sq else 1          # broadcast q-dim => single-row block

    def m_map(b, h, qt):
        return (b if Bm == B else 0,
                h if Hm == H else 0,
                qt if Sqm == Sq else 0,
                0)

    m_spec = pl.BlockSpec((None, None, tqm, Skm), m_map)

    out_shapes = (jax.ShapeDtypeStruct((B, H, Sq, dv), query.dtype),
                  jax.ShapeDtypeStruct((B, H, Sq, Sk), score_dtype))
    return pl.pallas_call(
        _attn_kernel_masked,
        grid=grid,
        in_specs=[q_spec, k_spec, v_spec, m_spec],
        out_specs=(out_spec, score_spec),
        out_shape=out_shapes,
        compiler_params=_compiler_params(vmem_limit),
    )(query, key, value, mask_i8)


# --------------------------------------------------------------------------
# Public API
# --------------------------------------------------------------------------
def attention(query, key, value, mask=None, *, causal=False, score_dtype=None):
    """Pallas equivalent of Attention.forward(query, key, value, mask).

    query: [B, H, Sq, d_k]; key: [B, H, Sk, d_k]; value: [B, H, Sk, d_v]
    mask (optional): bool/int, broadcastable to [B, H, Sq, Sk]; truthy => -inf.
    causal: fast path; equivalent to mask = triu(ones(Sq, Sk), k=1) but the
            mask is generated in-kernel (no mask HBM stream).
    score_dtype: dtype of the returned attention_score (default: query.dtype);
            pass jnp.bfloat16 to halve the dominant score-writeback stream.
    Returns (attention_result [B,H,Sq,d_v], attention_score [B,H,Sq,Sk]).
    Note: fully-masked rows yield NaN, same as the PyTorch reference.
    """
    if causal and mask is not None:
        raise ValueError("pass either `mask` or `causal=True`, not both")

    B, H, Sq, dk = query.shape
    Sk, dv = key.shape[2], value.shape[3]
    score_dtype = np.dtype(query.dtype if score_dtype is None else score_dtype)
    in_bytes = np.dtype(query.dtype).itemsize
    score_bytes = score_dtype.itemsize

    cap = _vmem_capacity_bytes()
    vmem_limit = int(0.85 * cap)          # headroom for compiler scratch
    budget = int(0.70 * cap)              # budget for tile-size selection

    if mask is None:
        tq = _pick_tq(Sq, Sk, dk, dv, in_bytes, score_bytes, 0, budget)
        return _attention_unmasked_call(query, key, value, tq=tq,
                                        score_dtype=score_dtype, causal=causal,
                                        vmem_limit=vmem_limit)

    m = jnp.asarray(mask)
    if m.ndim < 4:                        # left-pad rank to 4 (broadcast dims)
        m = m.reshape((1,) * (4 - m.ndim) + m.shape)
    Bm, Hm, Sqm, Skm = m.shape
    if (Bm not in (1, B) or Hm not in (1, H)
            or Sqm not in (1, Sq) or Skm not in (1, Sk)):
        raise ValueError(f"mask shape {m.shape} not broadcastable to "
                         f"{(B, H, Sq, Sk)}")
    # int8 mask: 4x less HBM traffic than a broadcast f32 mask; size-1 dims
    # stay size-1 in HBM and are broadcast via index_map / in-register.
    tq = _pick_tq(Sq, Sk, dk, dv, in_bytes, score_bytes, Skm, budget)
    return _attention_masked_call(query, key, value, m.astype(jnp.int8), tq=tq,
                                  score_dtype=score_dtype,
                                  vmem_limit=vmem_limit)


# --------------------------------------------------------------------------
# Reference + tests
# --------------------------------------------------------------------------
def _reference(query, key, value, mask=None):
    d_k = query.shape[-1]
    s = jnp.matmul(query, jnp.swapaxes(key, -2, -1)) / math.sqrt(d_k)
    if mask is not None:
        s = jnp.where(jnp.asarray(mask) != 0, -jnp.inf, s)
    p = jax.nn.softmax(s, axis=-1)
    return jnp.matmul(p, value), p


if __name__ == "__main__":
    keys = jax.random.split(jax.random.PRNGKey(0), 6)

    # --- Small case: B=2, H=2, S=8, d=32
    B, H, S, D = 2, 2, 8, 32
    q = jax.random.normal(keys[0], (B, H, S, D), dtype=jnp.float32)
    k = jax.random.normal(keys[1], (B, H, S, D), dtype=jnp.float32)
    v = jax.random.normal(keys[2], (B, H, S, D), dtype=jnp.float32)
    causal_mask = jnp.triu(jnp.ones((S, S), dtype=bool), k=1)[None, None]

    # 1) explicit broadcastable (1,1,S,S) boolean mask
    out, score = jax.block_until_ready(attention(q, k, v, causal_mask))
    ref_out, ref_score = _reference(q, k, v, causal_mask)
    assert jnp.allclose(out, ref_out, atol=2e-3, rtol=2e-3)
    assert jnp.allclose(score, ref_score, atol=2e-3, rtol=2e-3)

    # 2) in-kernel causal fast path (no mask HBM stream)
    out_c, score_c = jax.block_until_ready(attention(q, k, v, causal=True))
    assert jnp.allclose(out_c, ref_out, atol=2e-3, rtol=2e-3)
    assert jnp.allclose(score_c, ref_score, atol=2e-3, rtol=2e-3)

    # 3) unmasked path (no dummy mask buffer is allocated)
    out2, score2 = jax.block_until_ready(attention(q, k, v, None))
    ref_out2, ref_score2 = _reference(q, k, v, None)
    assert jnp.allclose(out2, ref_out2, atol=2e-3, rtol=2e-3)
    assert jnp.allclose(score2, ref_score2, atol=2e-3, rtol=2e-3)

    # 4) bf16 score writeback option (halves the dominant HBM stream)
    out_b, score_b = jax.block_until_ready(
        attention(q, k, v, causal_mask, score_dtype=jnp.bfloat16))
    assert score_b.dtype == jnp.bfloat16
    assert jnp.allclose(out_b, ref_out, atol=2e-3, rtol=2e-3)
    assert jnp.allclose(score_b.astype(jnp.float32), ref_score,
                        atol=2e-2, rtol=2e-2)

    # --- Larger case exercising the q-tiling path (and a partial last tile)
    B2, H2, S2, D2 = 1, 2, 768, 64
    q3 = jax.random.normal(keys[3], (B2, H2, S2, D2), dtype=jnp.float32)
    k3 = jax.random.normal(keys[4], (B2, H2, S2, D2), dtype=jnp.float32)
    v3 = jax.random.normal(keys[5], (B2, H2, S2, D2), dtype=jnp.float32)
    out3, score3 = jax.block_until_ready(attention(q3, k3, v3, causal=True))
    causal2 = jnp.triu(jnp.ones((S2, S2), dtype=bool), k=1)[None, None]
    ref_out3, ref_score3 = _reference(q3, k3, v3, causal2)
    assert jnp.allclose(out3, ref_out3, atol=2e-3, rtol=2e-3)
    assert jnp.allclose(score3, ref_score3, atol=2e-3, rtol=2e-3)

    print("KERNEL_OK")
</pallas_src>

<mosaic_0001>
module attributes {stable_mosaic.version = 11 : i64} {
  func.func @_attn_kernel_masked(%arg0: i32, %arg1: i32, %arg2: i32, %arg3: memref<1x1x8x32xf32, #tpu.memory_space<vmem>>, %arg4: memref<1x1x8x32xf32, #tpu.memory_space<vmem>>, %arg5: memref<1x1x8x32xf32, #tpu.memory_space<vmem>>, %arg6: memref<1x1x8x8xi8, #tpu.memory_space<vmem>>, %arg7: memref<1x1x8x32xf32, #tpu.memory_space<vmem>>, %arg8: memref<1x1x8x8xf32, #tpu.memory_space<vmem>>) attributes {dimension_semantics = [#tpu.dimension_semantics<parallel>, #tpu.dimension_semantics<parallel>, #tpu.dimension_semantics<arbitrary>], iteration_bounds = array<i64: 2, 2, 1>, scalar_prefetch = 0 : i64, scratch_operands = 0 : i64, tpu.core_type = #tpu.core_type<tc>, window_params = [{transform_indices = @transform_0, window_bounds = array<i64: 1, 1, 8, 32>}, {transform_indices = @transform_1, window_bounds = array<i64: 1, 1, 8, 32>}, {transform_indices = @transform_2, window_bounds = array<i64: 1, 1, 8, 32>}, {transform_indices = @transform_3, window_bounds = array<i64: 1, 1, 8, 8>}, {transform_indices = @transform_4, window_bounds = array<i64: 1, 1, 8, 32>}, {transform_indices = @transform_5, window_bounds = array<i64: 1, 1, 8, 8>}]} {
    %c0 = arith.constant 0 : index
    %c0_0 = arith.constant 0 : index
    %c0_1 = arith.constant 0 : index
    %c0_2 = arith.constant 0 : index
    %0 = vector.load %arg6[%c0, %c0_0, %c0_1, %c0_2] : memref<1x1x8x8xi8, #tpu.memory_space<vmem>>, vector<1x1x8x8xi8>
    %1 = vector.shape_cast %0 : vector<1x1x8x8xi8> to vector<8x8xi8>
    %c0_i8 = arith.constant 0 : i8
    %2 = vector.broadcast %c0_i8 : i8 to vector<8x8xi8>
    %3 = arith.cmpi ne, %1, %2 : vector<8x8xi8>
    %c0_3 = arith.constant 0 : index
    %c0_4 = arith.constant 0 : index
    %c0_5 = arith.constant 0 : index
    %c0_6 = arith.constant 0 : index
    %4 = vector.load %arg3[%c0_3, %c0_4, %c0_5, %c0_6] : memref<1x1x8x32xf32, #tpu.memory_space<vmem>>, vector<1x1x8x32xf32>
    %5 = vector.shape_cast %4 : vector<1x1x8x32xf32> to vector<8x32xf32>
    %cst = arith.constant 0.176776692 : f32
    %6 = vector.broadcast %cst : f32 to vector<8x32xf32>
    %7 = arith.mulf %5, %6 : vector<8x32xf32>
    %c0_7 = arith.constant 0 : index
    %c0_8 = arith.constant 0 : index
    %c0_9 = arith.constant 0 : index
    %c0_10 = arith.constant 0 : index
    %8 = vector.load %arg4[%c0_7, %c0_8, %c0_9, %c0_10] : memref<1x1x8x32xf32, #tpu.memory_space<vmem>>, vector<1x1x8x32xf32>
    %9 = vector.shape_cast %8 : vector<1x1x8x32xf32> to vector<8x32xf32>
    %cst_11 = arith.constant dense<0.000000e+00> : vector<8x8xf32>
    %10 = tpu.matmul %7, %9, %cst_11 {dimension_numbers = #tpu.dot_dimension_numbers<[1], [1], [0], [0], [0, 0, 1, 0], [], []>} : vector<8x32xf32>, vector<8x32xf32>, vector<8x8xf32> -> vector<8x8xf32>
    %cst_12 = arith.constant 0xFF800000 : f32
    %11 = vector.broadcast %cst_12 : f32 to vector<8x8xf32>
    %12 = arith.select %3, %11, %10 : vector<8x8xi1>, vector<8x8xf32>
    %cst_13 = arith.constant dense<0xFF800000> : vector<8xf32>
    %13 = vector.multi_reduction <maximumf>, %12, %cst_13 [1] : vector<8x8xf32> to vector<8xf32>
    %14 = vector.shape_cast %13 : vector<8xf32> to vector<8x1xf32>
    %15 = vector.broadcast %14 : vector<8x1xf32> to vector<8x8xf32>
    %16 = arith.subf %12, %15 : vector<8x8xf32>
    %17 = math.exp %16 : vector<8x8xf32>
    %cst_14 = arith.constant dense<0.000000e+00> : vector<8xf32>
    %18 = vector.multi_reduction <add>, %17, %cst_14 [1] : vector<8x8xf32> to vector<8xf32>
    %19 = vector.shape_cast %18 : vector<8xf32> to vector<8x1xf32>
    %20 = tpu.reciprocal %19 {approx = true} : vector<8x1xf32> -> vector<8x1xf32>
    %21 = vector.broadcast %20 : vector<8x1xf32> to vector<8x8xf32>
    %22 = arith.mulf %17, %21 : vector<8x8xf32>
    %c0_15 = arith.constant 0 : index
    %c0_16 = arith.constant 0 : index
    %c0_17 = arith.constant 0 : index
    %c0_18 = arith.constant 0 : index
    %23 = vector.load %arg8[%c0_15, %c0_16, %c0_17, %c0_18] : memref<1x1x8x8xf32, #tpu.memory_space<vmem>>, vector<1x1x8x8xf32>
    %24 = vector.shape_cast %23 : vector<1x1x8x8xf32> to vector<8x8xf32>
    %25 = vector.shape_cast %22 : vector<8x8xf32> to vector<1x1x8x8xf32>
    tpu.vector_store %arg8[%c0_15, %c0_16, %c0_17, %c0_18], %25 {strides = array<i32>} : memref<1x1x8x8xf32, #tpu.memory_space<vmem>>, vector<1x1x8x8xf32>,
    %c0_19 = arith.constant 0 : index
    %c0_20 = arith.constant 0 : index
    %c0_21 = arith.constant 0 : index
    %c0_22 = arith.constant 0 : index
    %26 = vector.load %arg5[%c0_19, %c0_20, %c0_21, %c0_22] : memref<1x1x8x32xf32, #tpu.memory_space<vmem>>, vector<1x1x8x32xf32>
    %27 = vector.shape_cast %26 : vector<1x1x8x32xf32> to vector<8x32xf32>
    %cst_23 = arith.constant dense<0.000000e+00> : vector<8x32xf32>
    %28 = tpu.matmul %22, %27, %cst_23 {dimension_numbers = #tpu.dot_dimension_numbers<[1], [0], [0], [1], [0, 0, 1, 1], [], []>} : vector<8x8xf32>, vector<8x32xf32>, vector<8x32xf32> -> vector<8x32xf32>
    %c0_24 = arith.constant 0 : index
    %c0_25 = arith.constant 0 : index
    %c0_26 = arith.constant 0 : index
    %c0_27 = arith.constant 0 : index
    %29 = vector.load %arg7[%c0_24, %c0_25, %c0_26, %c0_27] : memref<1x1x8x32xf32, #tpu.memory_space<vmem>>, vector<1x1x8x32xf32>
    %30 = vector.shape_cast %29 : vector<1x1x8x32xf32> to vector<8x32xf32>
    %31 = vector.shape_cast %28 : vector<8x32xf32> to vector<1x1x8x32xf32>
    tpu.vector_store %arg7[%c0_24, %c0_25, %c0_26, %c0_27], %31 {strides = array<i32>} : memref<1x1x8x32xf32, #tpu.memory_space<vmem>>, vector<1x1x8x32xf32>,
    return
  }
  func.func @transform_0(%arg0: i32, %arg1: i32, %arg2: i32) -> (i32, i32, i32, i32) {
    %c0_i32 = arith.constant 0 : i32
    %c0_i32_0 = arith.constant 0 : i32
    return %arg0, %arg1, %arg2, %c0_i32 : i32, i32, i32, i32
  }
  func.func @transform_1(%arg0: i32, %arg1: i32, %arg2: i32) -> (i32, i32, i32, i32) {
    %c0_i32 = arith.constant 0 : i32
    %c0_i32_0 = arith.constant 0 : i32
    %c0_i32_1 = arith.constant 0 : i32
    return %arg0, %arg1, %c0_i32, %c0_i32_0 : i32, i32, i32, i32
  }
  func.func @transform_2(%arg0: i32, %arg1: i32, %arg2: i32) -> (i32, i32, i32, i32) {
    %c0_i32 = arith.constant 0 : i32
    %c0_i32_0 = arith.constant 0 : i32
    %c0_i32_1 = arith.constant 0 : i32
    return %arg0, %arg1, %c0_i32, %c0_i32_0 : i32, i32, i32, i32
  }
  func.func @transform_3(%arg0: i32, %arg1: i32, %arg2: i32) -> (i32, i32, i32, i32) {
    %c0_i32 = arith.constant 0 : i32
    %c0_i32_0 = arith.constant 0 : i32
    %c0_i32_1 = arith.constant 0 : i32
    %c0_i32_2 = arith.constant 0 : i32
    return %c0_i32, %c0_i32_0, %arg2, %c0_i32_1 : i32, i32, i32, i32
  }
  func.func @transform_4(%arg0: i32, %arg1: i32, %arg2: i32) -> (i32, i32, i32, i32) {
    %c0_i32 = arith.constant 0 : i32
    %c0_i32_0 = arith.constant 0 : i32
    return %arg0, %arg1, %arg2, %c0_i32 : i32, i32, i32, i32
  }
  func.func @transform_5(%arg0: i32, %arg1: i32, %arg2: i32) -> (i32, i32, i32, i32) {
    %c0_i32 = arith.constant 0 : i32
    %c0_i32_0 = arith.constant 0 : i32
    return %arg0, %arg1, %arg2, %c0_i32 : i32, i32, i32, i32
  }
}

</mosaic_0001>

<llo_original>
// kernel: _attention_masked_call.1
$region0: #{_attention_masked_call.1}
  #allocation0 [shape = 'u32[]', space=smem, size = 0x4, offset = 0x4, fixed_abs, tag = 'smem constant byte address 0x4 - core index']
  #allocation1 [shape = 'u32[72,128]{1,0:T(1,128)}', space=vmem, size = 0x9000, scoped, tag = 'internal scratch']
  %s0 = inlined_call_operand.hbm [shape: f32[2,2,8,32], index: 0, kind: input, shape index: {}]
  %s1 = inlined_call_operand.hbm [shape: f32[2,2,8,32], index: 1, kind: input, shape index: {}]
  %s2 = inlined_call_operand.hbm [shape: f32[2,2,8,32], index: 2, kind: input, shape index: {}]
  %s3 = inlined_call_operand.vmem [shape: s8[1,1,8,8], index: 3, kind: input, shape index: {}]
  %s4 = inlined_call_operand.hbm [shape: f32[2,2,8,32], index: 4, kind: output, shape index: {0}]
  %s5 = inlined_call_operand.hbm [shape: f32[2,2,8,8], index: 5, kind: output, shape index: {1}]
  %6 = xla_tuple %s4, %s5
  %s7 = sld [smem:[#allocation0]]
  $region69: #{_attention_masked_call.1} parent=0
    _
  %s9 = ssub.s32 1, %s7
  %s10 = scalar_select 0, %s9, %s7
  $region1: #{_attention_masked_call.1} parent=0
    #allocation2 [shape = 'u8[8192]{0}', space=vmem, size = 0x2000, scoped, tag = 'input window, operand 0']
    #allocation3 [shape = 's32[2]{0}', space=sflag, size = 0x8, scoped, tag = 'scoped memory for _attention_masked_call.1']
    #allocation4 [shape = 's32[2]{0}', space=sflag, size = 0x8, scoped, tag = 'scoped memory for _attention_masked_call.1']
    #allocation5 [shape = 'u8[8192]{0}', space=vmem, size = 0x2000, scoped, tag = 'input window, operand 1']
    #allocation6 [shape = 's32[2]{0}', space=sflag, size = 0x8, scoped, tag = 'scoped memory for _attention_masked_call.1']
    #allocation7 [shape = 'u8[8192]{0}', space=vmem, size = 0x2000, scoped, tag = 'input window, operand 2']
    #allocation8 [shape = 'u8[8192]{0}', space=vmem, size = 0x2000, scoped, tag = 'output window, operand 0']
    #allocation9 [shape = 'u8[8192]{0}', space=vmem, size = 0x2000, scoped, tag = 'output window, operand 1']
    #allocation10 [shape = 's32[2]{0}', space=sflag, size = 0x8, scoped, tag = 'scoped memory for _attention_masked_call.1']
    %11 = vsyncpa [#allocation3], 0
    %s12 = scalar_lea.sflag [#allocation3], 1
    %13 = vsyncpa %s12, 0
    %14 = vsyncpa [#allocation6], 0
    %s15 = scalar_lea.sflag [#allocation6], 1
    %16 = vsyncpa %s15, 0
    %17 = vsyncpa [#allocation4], 0
    %s18 = scalar_lea.sflag [#allocation4], 1
    %19 = vsyncpa %s18, 0
    %20 = vsyncpa [#allocation10], 0
    %s21 = scalar_lea.sflag [#allocation10], 1
    %22 = vsyncpa %s21, 0
    loop: start=0, step=1, limit=6
    $region2: #{_attention_masked_call.1} parent=1 // loop_pre_header
      _
    $region3: #{_attention_masked_call.1} parent=1 // loop_header
      %s24 = sphi 0, %s28
      %p25 = scmp.ge.s32.totalorder %s24, 6
      %s31 = sphi 0, %s50
      %s32 = sphi 0, %s46
      %s33 = sphi 0, %s42
      %s34 = sphi 0, %s31
      %s35 = sphi 0, %s32
      %s36 = sphi 0, %s33
      %s37 = sphi 0, %s34
      %s38 = sphi 0, %s35
      %s39 = sphi 0, %s36
      %s57 = sphi 0, %s59
      %s60 = sphi 0, %s57
      %s61 = sphi 0, %s60
      %s77 = sphi 0, %s61
      %s85 = sphi 0, %s87
      %s88 = sphi 0, %s85
      %s89 = sphi 0, %s88
      %s105 = sphi 0, %s89
      %s113 = sphi 0, %s115
      %s116 = sphi 0, %s113
      %s117 = sphi 0, %s116
      %s133 = sphi 0, %s117
      %s139 = sphi 0, %s141
      %s142 = sphi 0, %s139
      %s143 = sphi 0, %s142
      %s159 = sphi 0, %s143
      %s169 = sphi 0, %s171
      %s172 = sphi 0, %s169
      %s173 = sphi 0, %s172
      %s189 = sphi 0, %s173
      %s199 = sphi 0, %s201
      %s202 = sphi 0, %s199
      %s203 = sphi 0, %s202
      %s219 = sphi 0, %s203
    $region4: #{_attention_masked_call.1} parent=1 // loop_header_branch
      %27 = sbr.rel (%p25) target = $region8
    $region5: #{_attention_masked_call.1} parent=1 // loop_body
      %s29 = ssub.s32 %s24, 1
      %s30 = ssub.s32 %s24, 2
      %s40 = sadd.s32 1, %s33
      %p41 = scmp.ge.s32.totalorder %s40, 1
      %s42 = scalar_select %p41, 0, %s40
      %s43 = sadd.s32 1, %s32
      %s44 = scalar_select %p41, %s43, %s32
      %p45 = scmp.ge.s32.totalorder %s44, 2
      %s46 = scalar_select %p45, 0, %s44
      %s47 = sadd.s32 1, %s31
      %s48 = scalar_select %p45, %s47, %s31
      %p49 = scmp.ge.s32.totalorder %s48, 2
      %s50 = scalar_select %p49, 0, %s48
      %s51 = ssub.s32 %s31, %s50
      %s52 = ssub.s32 %s32, %s46
      %s53 = sor.u32 %s51, %s52
      %s54 = ssub.s32 %s33, %s42
      %s55 = sor.u32 %s53, %s54
      %p56 = scmp.eq.s32.totalorder %s55, 0
      %s58 = sadd.s32 %s57, 1
      %s59 = scalar_select %p56, %s57, %s58
      %p62 = pneg %p56
      %p63 = scmp.eq.s32.totalorder %s24, 3
      %p64 = por %p62, %p63
      %p65 = scmp.ne.s32.totalorder %s57, %s60
      %p66 = scmp.eq.s32.totalorder %s24, 0
      %p67 = por %p65, %p66
      %p68 = scmp.ne.s32.totalorder %s57, %s60
      %p69 = scmp.eq.s32.totalorder %s29, 3
      %p70 = por %p68, %p69
      %p71 = scmp.ne.s32.totalorder %s60, %s61
      %p72 = scmp.eq.s32.totalorder %s29, 0
      %p73 = por %p71, %p72
      %p74 = scmp.ne.s32.totalorder %s60, %s61
      %p75 = scmp.eq.s32.totalorder %s30, 3
      %p76 = por %p74, %p75
      %p78 = scmp.ne.s32.totalorder %s61, %s77
      %p79 = scmp.eq.s32.totalorder %s30, 0
      %p80 = por %p78, %p79
      %s81 = ssub.s32 %s31, %s50
      %s82 = ssub.s32 %s32, %s46
      %s83 = sor.u32 %s81, %s82
      %p84 = scmp.eq.s32.totalorder %s83, 0
      %s86 = sadd.s32 %s85, 1
      %s87 = scalar_select %p84, %s85, %s86
      %p90 = pneg %p84
      %p91 = scmp.eq.s32.totalorder %s24, 3
      %p92 = por %p90, %p91
      %p93 = scmp.ne.s32.totalorder %s85, %s88
      %p94 = scmp.eq.s32.totalorder %s24, 0
      %p95 = por %p93, %p94
      %p96 = scmp.ne.s32.totalorder %s85, %s88
      %p97 = scmp.eq.s32.totalorder %s29, 3
      %p98 = por %p96, %p97
      %p99 = scmp.ne.s32.totalorder %s88, %s89
      %p100 = scmp.eq.s32.totalorder %s29, 0
      %p101 = por %p99, %p100
      %p102 = scmp.ne.s32.totalorder %s88, %s89
      %p103 = scmp.eq.s32.totalorder %s30, 3
      %p104 = por %p102, %p103
      %p106 = scmp.ne.s32.totalorder %s89, %s105
      %p107 = scmp.eq.s32.totalorder %s30, 0
      %p108 = por %p106, %p107
      %s109 = ssub.s32 %s31, %s50
      %s110 = ssub.s32 %s32, %s46
      %s111 = sor.u32 %s109, %s110
      %p112 = scmp.eq.s32.totalorder %s111, 0
      %s114 = sadd.s32 %s113, 1
      %s115 = scalar_select %p112, %s113, %s114
      %p118 = pneg %p112
      %p119 = scmp.eq.s32.totalorder %s24, 3
      %p120 = por %p118, %p119
      %p121 = scmp.ne.s32.totalorder %s113, %s116
      %p122 = scmp.eq.s32.totalorder %s24, 0
      %p123 = por %p121, %p122
      %p124 = scmp.ne.s32.totalorder %s113, %s116
      %p125 = scmp.eq.s32.totalorder %s29, 3
      %p126 = por %p124, %p125
      %p127 = scmp.ne.s32.totalorder %s116, %s117
      %p128 = scmp.eq.s32.totalorder %s29, 0
      %p129 = por %p127, %p128
      %p130 = scmp.ne.s32.totalorder %s116, %s117
      %p131 = scmp.eq.s32.totalorder %s30, 3
      %p132 = por %p130, %p131
      %p134 = scmp.ne.s32.totalorder %s117, %s133
      %p135 = scmp.eq.s32.totalorder %s30, 0
      %p136 = por %p134, %p135
      %s137 = ssub.s32 %s33, %s42
      %p138 = scmp.eq.s32.totalorder %s137, 0
      %s140 = sadd.s32 %s139, 1
      %s141 = scalar_select %p138, %s139, %s140
      %p144 = pneg %p138
      %p145 = scmp.eq.s32.totalorder %s24, 3
      %p146 = por %p144, %p145
      %p147 = scmp.ne.s32.totalorder %s139, %s142
      %p148 = scmp.eq.s32.totalorder %s24, 0
      %p149 = por %p147, %p148
      %p150 = scmp.ne.s32.totalorder %s139, %s142
      %p151 = scmp.eq.s32.totalorder %s29, 3
      %p152 = por %p150, %p151
      %p153 = scmp.ne.s32.totalorder %s142, %s143
      %p154 = scmp.eq.s32.totalorder %s29, 0
      %p155 = por %p153, %p154
      %p156 = scmp.ne.s32.totalorder %s142, %s143
      %p157 = scmp.eq.s32.totalorder %s30, 3
      %p158 = por %p156, %p157
      %p160 = scmp.ne.s32.totalorder %s143, %s159
      %p161 = scmp.eq.s32.totalorder %s30, 0
      %p162 = por %p160, %p161
      %s163 = ssub.s32 %s31, %s50
      %s164 = ssub.s32 %s32, %s46
      %s165 = sor.u32 %s163, %s164
      %s166 = ssub.s32 %s33, %s42
      %s167 = sor.u32 %s165, %s166
      %p168 = scmp.eq.s32.totalorder %s167, 0
      %s170 = sadd.s32 %s169, 1
      %s171 = scalar_select %p168, %s169, %s170
      %p174 = pneg %p168
      %p175 = scmp.eq.s32.totalorder %s24, 3
      %p176 = por %p174, %p175
      %p177 = scmp.ne.s32.totalorder %s169, %s172
      %p178 = scmp.eq.s32.totalorder %s24, 0
      %p179 = por %p177, %p178
      %p180 = scmp.ne.s32.totalorder %s169, %s172
      %p181 = scmp.eq.s32.totalorder %s29, 3
      %p182 = por %p180, %p181
      %p183 = scmp.ne.s32.totalorder %s172, %s173
      %p184 = scmp.eq.s32.totalorder %s29, 0
      %p185 = por %p183, %p184
      %p186 = scmp.ne.s32.totalorder %s172, %s173
      %p187 = scmp.eq.s32.totalorder %s30, 3
      %p188 = por %p186, %p187
      %p190 = scmp.ne.s32.totalorder %s173, %s189
      %p191 = scmp.eq.s32.totalorder %s30, 0
      %p192 = por %p190, %p191
      %s193 = ssub.s32 %s31, %s50
      %s194 = ssub.s32 %s32, %s46
      %s195 = sor.u32 %s193, %s194
      %s196 = ssub.s32 %s33, %s42
      %s197 = sor.u32 %s195, %s196
      %p198 = scmp.eq.s32.totalorder %s197, 0
      %s200 = sadd.s32 %s199, 1
      %s201 = scalar_select %p198, %s199, %s200
      %p204 = pneg %p198
      %p205 = scmp.eq.s32.totalorder %s24, 3
      %p206 = por %p204, %p205
      %p207 = scmp.ne.s32.totalorder %s199, %s202
      %p208 = scmp.eq.s32.totalorder %s24, 0
      %p209 = por %p207, %p208
      %p210 = scmp.ne.s32.totalorder %s199, %s202
      %p211 = scmp.eq.s32.totalorder %s29, 3
      %p212 = por %p210, %p211
      %p213 = scmp.ne.s32.totalorder %s202, %s203
      %p214 = scmp.eq.s32.totalorder %s29, 0
      %p215 = por %p213, %p214
      %p216 = scmp.ne.s32.totalorder %s202, %s203
      %p217 = scmp.eq.s32.totalorder %s30, 3
      %p218 = por %p216, %p217
      %p220 = scmp.ne.s32.totalorder %s203, %s219
      %p221 = scmp.eq.s32.totalorder %s30, 0
      %p222 = por %p220, %p221
      %p223 = scmp.le.s32.totalorder 1, %s24
      %p224 = scmp.lt.s32.totalorder %s24, 5
      %p225 = pnand %p223, %p224
      %p226 = pneg %p225
      // Predicated region
      $region9: #{_attention_masked_call.1} parent=5 // pred_check
        _
      $region10: #{_attention_masked_call.1} parent=5 // pred_check_branch
        %228 = sbr.rel (%p225) target = $region12
      $region11: #{_attention_masked_call.1} parent=5 // pred_region
        %s229 = ssub.s32 %s24, 1
        // Predicated region
        $region13: #{_attention_masked_call.1} parent=11 // pred_check
          %p230 = pneg %p155
        $region14: #{_attention_masked_call.1} parent=11 // pred_check_branch
          %232 = sbr.rel (%p230) target = $region16
        $region15: #{_attention_masked_call.1} parent=11 // pred_region
          %p233 = scmp.lt.s32.totalorder %s36, 0
          %s234 = scalar_select %p233, %s36, 0
          %s235 = smul.addr %s234, 2
          %s236 = scalar_lea.vmem %s3, %s235
        $region16: #{_attention_masked_call.1} parent=11 // pred_fallthru
          _
      $region12: #{_attention_masked_call.1} parent=5 // pred_fallthru
        _
      %p237 = scmp.lt.s32.totalorder %s24, 4
      // Predicated region
      $region17: #{_attention_masked_call.1} parent=5 // pred_check
        %p238 = pneg %p237
      $region18: #{_attention_masked_call.1} parent=5 // pred_check_branch
        %240 = sbr.rel (%p238) target = $region20
      $region19: #{_attention_masked_call.1} parent=5 // pred_region
        // Predicated region
        $region21: #{_attention_masked_call.1} parent=19 // pred_check
          %p241 = pneg %p67
        $region22: #{_attention_masked_call.1} parent=19 // pred_check_branch
          %243 = sbr.rel (%p241) target = $region24
        $region23: #{_attention_masked_call.1} parent=19 // pred_region
          %s244 = sand.u32 %s57, 1
          %s245 = scalar_lea.sflag [#allocation3], %s244
          %s246 = sand.u32 %s57, 1
          %s247 = smul.addr %s246, 8
          %s248 = scalar_lea.vmem [#allocation2], %s247
          %250 = vsyncadd %s245, 0
          %s251 = sadd.s32 %s33, %s32
          %s252 = smul.addr %s31, 2
          %s253 = sadd.s32 %s251, %s252
          %s254 = smul.addr %s253, 8
          %s255 = scalar_lea.hbm %s0, %s254
          %s257 = sshll.u32 %s255, 4
          %s258 = int_to_ptr.hbm [resolvable:$true] %s257
          %s259 = sshll.u32 %s248, 4
          %s260 = int_to_ptr.vmem [resolvable:$true] %s259
          %262 = dma.hbm_to_vmem [thread:$0]  %s258, 128, %s260, %s245
        $region24: #{_attention_masked_call.1} parent=19 // pred_fallthru
          _
        // Predicated region
        $region25: #{_attention_masked_call.1} parent=19 // pred_check
          %p263 = pneg %p95
        $region26: #{_attention_masked_call.1} parent=19 // pred_check_branch
          %265 = sbr.rel (%p263) target = $region28
        $region27: #{_attention_masked_call.1} parent=19 // pred_region
          %s266 = sand.u32 %s24, 1
          %s267 = scalar_lea.sflag [#allocation6], %s266
          %s268 = sand.u32 %s85, 1
          %s269 = smul.addr %s268, 8
          %s270 = scalar_lea.vmem [#allocation5], %s269
          %272 = vsyncadd %s267, 0
          %s273 = smul.addr %s31, 2
          %s274 = sadd.s32 %s32, %s273
          %s275 = smul.addr %s274, 8
          %s276 = scalar_lea.hbm %s1, %s275
          %s278 = sshll.u32 %s276, 4
          %s279 = int_to_ptr.hbm [resolvable:$true] %s278
          %s280 = sshll.u32 %s270, 4
          %s281 = int_to_ptr.vmem [resolvable:$true] %s280
          %283 = dma.hbm_to_vmem [thread:$0]  %s279, 128, %s281, %s267
        $region28: #{_attention_masked_call.1} parent=19 // pred_fallthru
          _
        // Predicated region
        $region29: #{_attention_masked_call.1} parent=19 // pred_check
          %p284 = pneg %p123
        $region30: #{_attention_masked_call.1} parent=19 // pred_check_branch
          %286 = sbr.rel (%p284) target = $region32
        $region31: #{_attention_masked_call.1} parent=19 // pred_region
          %s287 = sand.u32 %s24, 1
          %s288 = scalar_lea.sflag [#allocation6], %s287
          %s289 = sand.u32 %s113, 1
          %s290 = smul.addr %s289, 8
          %s291 = scalar_lea.vmem [#allocation7], %s290
          %293 = vsyncadd %s288, 0
          %s294 = smul.addr %s31, 2
          %s295 = sadd.s32 %s32, %s294
          %s296 = smul.addr %s295, 8
          %s297 = scalar_lea.hbm %s2, %s296
          %s299 = sshll.u32 %s297, 4
          %s300 = int_to_ptr.hbm [resolvable:$true] %s299
          %s301 = sshll.u32 %s291, 4
          %s302 = int_to_ptr.vmem [resolvable:$true] %s301
          %304 = dma.hbm_to_vmem [thread:$0]  %s300, 128, %s302, %s288
        $region32: #{_attention_masked_call.1} parent=19 // pred_fallthru
          _
      $region20: #{_attention_masked_call.1} parent=5 // pred_fallthru
        _
      %p305 = scmp.le.s32.totalorder 1, %s24
      %p306 = scmp.lt.s32.totalorder %s24, 5
      %p307 = pnand %p305, %p306
      %p308 = pneg %p307
      // Predicated region
      $region33: #{_attention_masked_call.1} parent=5 // pred_check
        _
      $region34: #{_attention_masked_call.1} parent=5 // pred_check_branch
        %310 = sbr.rel (%p307) target = $region36
      $region35: #{_attention_masked_call.1} parent=5 // pred_region
        %s311 = ssub.s32 %s24, 1
        %s312 = sand.u32 %s60, 1
        %s313 = scalar_lea.sflag [#allocation3], %s312
        %s314 = sand.u32 %s60, 1
        %s315 = smul.addr %s314, 8
        %s316 = scalar_lea.vmem [#allocation2], %s315
        // Predicated region
        $region37: #{_attention_masked_call.1} parent=35 // pred_check
          %p317 = pneg %p73
        $region38: #{_attention_masked_call.1} parent=35 // pred_check_branch
          %319 = sbr.rel (%p317) target = $region40
        $region39: #{_attention_masked_call.1} parent=35 // pred_region
          %321 = dma.done %s313, 128
        $region40: #{_attention_masked_call.1} parent=35 // pred_fallthru
          _
        %s322 = sand.u32 %s29, 1
        %s323 = scalar_lea.sflag [#allocation6], %s322
        %s324 = sand.u32 %s88, 1
        %s325 = smul.addr %s324, 8
        %s326 = scalar_lea.vmem [#allocation5], %s325
        // Predicated region
        $region41: #{_attention_masked_call.1} parent=35 // pred_check
          %p327 = pneg %p101
        $region42: #{_attention_masked_call.1} parent=35 // pred_check_branch
          %329 = sbr.rel (%p327) target = $region44
        $region43: #{_attention_masked_call.1} parent=35 // pred_region
          %331 = dma.done %s323, 128
        $region44: #{_attention_masked_call.1} parent=35 // pred_fallthru
          _
        %s332 = sand.u32 %s29, 1
        %s333 = scalar_lea.sflag [#allocation6], %s332
        %s334 = sand.u32 %s116, 1
        %s335 = smul.addr %s334, 8
        %s336 = scalar_lea.vmem [#allocation7], %s335
        // Predicated region
        $region45: #{_attention_masked_call.1} parent=35 // pred_check
          %p337 = pneg %p129
        $region46: #{_attention_masked_call.1} parent=35 // pred_check_branch
          %339 = sbr.rel (%p337) target = $region48
        $region47: #{_attention_masked_call.1} parent=35 // pred_region
          %341 = dma.done %s333, 128
        $region48: #{_attention_masked_call.1} parent=35 // pred_fallthru
          _
        %s342 = sand.u32 %s60, 1
        %s343 = scalar_lea.sflag [#allocation3], %s342
        %s344 = sand.u32 %s60, 1
        %s345 = smul.addr %s344, 8
        %s346 = scalar_lea.vmem [#allocation2], %s345
        %p347 = pneg %p73
        %p348 = pneg %p70
        %s349 = sand.u32 %s29, 1
        %s350 = scalar_lea.sflag [#allocation6], %s349
        %s351 = sand.u32 %s88, 1
        %s352 = smul.addr %s351, 8
        %s353 = scalar_lea.vmem [#allocation5], %s352
        %p354 = pneg %p101
        %p355 = pneg %p98
        %s356 = sand.u32 %s29, 1
        %s357 = scalar_lea.sflag [#allocation6], %s356
        %s358 = sand.u32 %s116, 1
        %s359 = smul.addr %s358, 8
        %s360 = scalar_lea.vmem [#allocation7], %s359
        %p361 = pneg %p129
        %p362 = pneg %p126
        %p363 = scmp.lt.s32.totalorder %s36, 0
        %s364 = scalar_select %p363, %s36, 0
        %s365 = smul.addr %s364, 2
        %s366 = scalar_lea.vmem %s3, %s365
        %p367 = pneg %p155
        %p368 = pneg %p152
        %p369 = pneg %p185
        %p370 = pneg %p182
        %s371 = sand.u32 %s172, 1
        %s372 = scalar_lea.sflag [#allocation4], %s371
        %s373 = sand.u32 %s172, 1
        %s374 = smul.addr %s373, 8
        %s375 = scalar_lea.vmem [#allocation8], %s374
        %p376 = pneg %p215
        %p377 = pneg %p212
        %s378 = sand.u32 %s202, 1
        %s379 = scalar_lea.sflag [#allocation10], %s378
        %s380 = sand.u32 %s202, 1
        %s381 = smul.addr %s380, 8
        %s382 = scalar_lea.vmem [#allocation9], %s381
        %p383 = scmp.lt.s32.totalorder %s36, 0
        %s384 = scalar_select %p383, %s36, 0
        %s385 = smul.addr %s384, 2
        %s386 = scalar_lea.vmem %s3, %s385
        %v389 = vld [vmem:[%s386] sm:$0x3]
        %vm390 = vnez %v389
        %v391 = vld [vmem:[%s316] sm:$0xff]
        %v392 = vmul.f32 %v391, 0.17677669
        %v393 = vld [vmem:[%s326] sm:$0xff]
        %vm394 = vcmask 261120
        %v396 = vsel %vm394, %v392, 0
        %v399 = vsel %vm394, %v393, 0
        %401 = vmatpush.xpose.msra.mxu0 0.0
        %402 = vmatpush.xpose.msra.mxu0 0.0
        %403 = vmatpush.xpose.msra.mxu0 0.0
        %404 = vmatpush.xpose.msra.mxu0 0.0
        %405 = vmatpush.xpose.msra.mxu0 0.0
        %406 = vmatpush.xpose.msra.mxu0 0.0
        %407 = vmatpush.xpose.msra.mxu0 0.0
        %408 = vmatpush.xpose.msra.mxu0 0.0
        %409 = vmatpush.xpose.msra.mxu0 0.0
        %410 = vmatpush.xpose.msra.mxu0 0.0
        %411 = vmatpush.xpose.msra.mxu0 0.0
        %412 = vmatpush.xpose.msra.mxu0 0.0
        %413 = vmatpush.xpose.msra.mxu0 0.0
        %414 = vmatpush.xpose.msra.mxu0 0.0
        %415 = vmatpush.xpose.msra.mxu0 0.0
        %416 = vmatpush.xpose.msra.mxu0 %v399
        %417 = vmatmul.f32.gmra.mxu0 %v396
        %v418 = vpop.f32.mrf.mxu0
        %v419 = vadd.f32 0.0, %v418
        %420 = vdwg.mxu0
        %v421 = vsel %vm390, 16843009, 0
        %v422 = vunpack.c.0.s8 %v421
        %vm423 = vcmp.ne.s32.totalorder %v422, 0
        %v424 = vsel %vm423, -inf, %v419
        %vm425 = vcmask 64512
        %v426 = vsel %vm425, %v424, -inf
        %427 = vmax.xlane.f32.xlu0 %v426
        %v428 = vpop.xlane.xlu0 %427
        %v429 = vsub.f32 %v424, %v428
        %v430 = vmul.f32 %v429, 1.442695
        %v431 = vpow.pop %v430
        %v432 = vsel %vm425, %v431, 0.0
        %433 = vadd.xlane.f32.xlu0 %v432
        %v434 = vpop.xlane.xlu0 %433
        %v435 = vrcp.pop %v434
        %v436 = vmul.f32 %v431, %v435
        %437 = vst.msk [vmem:[%s382] sm:$0xff] %vm425, %v436
        %v438 = vld [vmem:[%s336] sm:$0xff]
        %v440 = vsel %vm425, %v436, 0
        %442 = vmatpush.msra.mxu0 0.0
        %443 = vmatpush.msra.mxu0 0.0
        %444 = vmatpush.msra.mxu0 0.0
        %445 = vmatpush.msra.mxu0 0.0
        %446 = vmatpush.msra.mxu0 0.0
        %447 = vmatpush.msra.mxu0 0.0
        %448 = vmatpush.msra.mxu0 0.0
        %449 = vmatpush.msra.mxu0 0.0
        %450 = vmatpush.msra.mxu0 0.0
        %451 = vmatpush.msra.mxu0 0.0
        %452 = vmatpush.msra.mxu0 0.0
        %453 = vmatpush.msra.mxu0 0.0
        %454 = vmatpush.msra.mxu0 0.0
        %455 = vmatpush.msra.mxu0 0.0
        %456 = vmatpush.msra.mxu0 0.0
        %457 = vmatpush.msra.mxu0 %v438
        %458 = vmatmul.f32.gmra.mxu0 %v440
        %v459 = vpop.f32.mrf.mxu0
        %v460 = vadd.f32 0.0, %v459
        %461 = vdwg.mxu0
        %462 = vst.msk [vmem:[%s375] sm:$0xff] %vm394, %v460
        %s463 = sand.u32 %s172, 1
        %s464 = scalar_lea.sflag [#allocation4], %s463
        %s465 = sand.u32 %s172, 1
        %s466 = smul.addr %s465, 8
        %s467 = scalar_lea.vmem [#allocation8], %s466
        %s468 = sand.u32 %s202, 1
        %s469 = scalar_lea.sflag [#allocation10], %s468
        %s470 = sand.u32 %s202, 1
        %s471 = smul.addr %s470, 8
        %s472 = scalar_lea.vmem [#allocation9], %s471
        // Predicated region
        $region49: #{_attention_masked_call.1} parent=35 // pred_check
          %p473 = pneg %p182
        $region50: #{_attention_masked_call.1} parent=35 // pred_check_branch
          %475 = sbr.rel (%p473) target = $region52
        $region51: #{_attention_masked_call.1} parent=35 // pred_region
          %477 = vsyncadd %s464, 0
          %s478 = sadd.s32 %s36, %s35
          %s479 = smul.addr %s34, 2
          %s480 = sadd.s32 %s478, %s479
          %s481 = smul.addr %s480, 8
          %s482 = scalar_lea.hbm %s4, %s481
          %s484 = sshll.u32 %s467, 4
          %s485 = int_to_ptr.vmem [resolvable:$true] %s484
          %s486 = sshll.u32 %s482, 4
          %s487 = int_to_ptr.hbm [resolvable:$true] %s486
          %489 = dma.vmem_to_hbm [thread:$0]  %s485, 128, %s487, %s464
        $region52: #{_attention_masked_call.1} parent=35 // pred_fallthru
          _
        // Predicated region
        $region53: #{_attention_masked_call.1} parent=35 // pred_check
          %p490 = pneg %p212
        $region54: #{_attention_masked_call.1} parent=35 // pred_check_branch
          %492 = sbr.rel (%p490) target = $region56
        $region55: #{_attention_masked_call.1} parent=35 // pred_region
          %494 = vsyncadd %s469, 0
          %s495 = sadd.s32 %s36, %s35
          %s496 = smul.addr %s34, 2
          %s497 = sadd.s32 %s495, %s496
          %s498 = smul.addr %s497, 8
          %s499 = scalar_lea.hbm %s5, %s498
          %s501 = sshll.u32 %s472, 4
          %s502 = int_to_ptr.vmem [resolvable:$true] %s501
          %s503 = sshll.u32 %s499, 4
          %s504 = int_to_ptr.hbm [resolvable:$true] %s503
          %506 = dma.vmem_to_hbm [thread:$0]  %s502, 128, %s504, %s469
        $region56: #{_attention_masked_call.1} parent=35 // pred_fallthru
          _
      $region36: #{_attention_masked_call.1} parent=5 // pred_fallthru
        _
      %p507 = scmp.le.s32.totalorder 2, %s24
      // Predicated region
      $region57: #{_attention_masked_call.1} parent=5 // pred_check
        %p508 = pneg %p507
      $region58: #{_attention_masked_call.1} parent=5 // pred_check_branch
        %510 = sbr.rel (%p508) target = $region60
      $region59: #{_attention_masked_call.1} parent=5 // pred_region
        %s511 = ssub.s32 %s24, 2
        // Predicated region
        $region61: #{_attention_masked_call.1} parent=59 // pred_check
          %p512 = pneg %p188
        $region62: #{_attention_masked_call.1} parent=59 // pred_check_branch
          %514 = sbr.rel (%p512) target = $region64
        $region63: #{_attention_masked_call.1} parent=59 // pred_region
          %s515 = sand.u32 %s173, 1
          %s516 = scalar_lea.sflag [#allocation4], %s515
          %s517 = sand.u32 %s173, 1
          %s518 = smul.addr %s517, 8
          %s519 = scalar_lea.vmem [#allocation8], %s518
          %521 = dma.done %s516, 128
        $region64: #{_attention_masked_call.1} parent=59 // pred_fallthru
          _
        // Predicated region
        $region65: #{_attention_masked_call.1} parent=59 // pred_check
          %p522 = pneg %p218
        $region66: #{_attention_masked_call.1} parent=59 // pred_check_branch
          %524 = sbr.rel (%p522) target = $region68
        $region67: #{_attention_masked_call.1} parent=59 // pred_region
          %s525 = sand.u32 %s203, 1
          %s526 = scalar_lea.sflag [#allocation10], %s525
          %s527 = sand.u32 %s203, 1
          %s528 = smul.addr %s527, 8
          %s529 = scalar_lea.vmem [#allocation9], %s528
          %531 = dma.done %s526, 128
        $region68: #{_attention_masked_call.1} parent=59 // pred_fallthru
          _
      $region60: #{_attention_masked_call.1} parent=5 // pred_fallthru
        _
    $region6: #{_attention_masked_call.1} parent=1 // loop_footer
      %s28 = sadd.s32 1, %s24
    $region7: #{_attention_masked_call.1} parent=1 // loop_footer_branch
      %23 = sbr.rel target = $region3
    $region8: #{_attention_masked_call.1} parent=1 // loop_exit
      _
    %532 = vsyncpa [#allocation3], 1
    %s533 = scalar_lea.sflag [#allocation3], 1
    %534 = vsyncpa %s533, 1
    %535 = vsyncpa [#allocation6], 1
    %s536 = scalar_lea.sflag [#allocation6], 1
    %537 = vsyncpa %s536, 1
    %538 = vsyncpa [#allocation4], 1
    %s539 = scalar_lea.sflag [#allocation4], 1
    %540 = vsyncpa %s539, 1
    %541 = vsyncpa [#allocation10], 1
    %s542 = scalar_lea.sflag [#allocation10], 1
    %543 = vsyncpa %s542, 1

</llo_original>
